<compile_context>
chip_gen: v7x
topology: tpu7x:2x2x1
jax: 0.10.0
libtpu: 0.0.40
codegen_flags: <defaults>
</compile_context>

<pallas_src>
import functools

import jax
import jax.numpy as jnp
from jax.experimental import pallas as pl
from jax.experimental.pallas import tpu as pltpu


# --------------------------------------------------------------------------- #
# Prologue kernel: one-shot per-head projection  x (B,S,Dm) @ w[h] -> bf16.   #
# --------------------------------------------------------------------------- #
def _kv_proj_kernel(x_ref, w_ref, out_ref):
    h = pl.program_id(1)
    out_ref[0, 0] = jnp.dot(
        x_ref[0], w_ref[h], preferred_element_type=jnp.float32
    ).astype(out_ref.dtype)


def _project_per_head(x_bf16, w_perhead):
    b, s, dm = x_bf16.shape
    nh, _, dh = w_perhead.shape
    return pl.pallas_call(
        _kv_proj_kernel,
        out_shape=jax.ShapeDtypeStruct((b, nh, s, dh), jnp.bfloat16),
        grid_spec=pltpu.PrefetchScalarGridSpec(
            num_scalar_prefetch=0,
            grid=(b, nh),
            in_specs=[
                # x block index is constant along h -> DMA'd once per batch.
                pl.BlockSpec((1, s, dm), lambda bi, hi: (bi, 0, 0)),
                # all-head weights resident in VMEM.
                pl.BlockSpec((nh, dm, dh), lambda bi, hi: (0, 0, 0)),
            ],
            out_specs=pl.BlockSpec((1, 1, s, dh), lambda bi, hi: (bi, hi, 0, 0)),
        ),
        compiler_params=pltpu.CompilerParams(
            dimension_semantics=("parallel", "parallel")),
    )(x_bf16, w_perhead)


# --------------------------------------------------------------------------- #
# Main kernel, flash variant (return_attn=False): grid (b, q_tile, head, k_t) #
# --------------------------------------------------------------------------- #
def _mha_flash_kernel(q_ref, k_ref, v_ref, wq_ref, wo_ref, gamma_ref, beta_ref,
                      out_ref, acc_ref, m_ref, l_ref, ctx_ref, qh_ref, *, eps):
    h = pl.program_id(2)
    kt = pl.program_id(3)
    last_h = h == pl.num_programs(2) - 1
    last_k = kt == pl.num_programs(3) - 1

    @pl.when(jnp.logical_and(h == 0, kt == 0))
    def _():
        acc_ref[...] = jnp.zeros_like(acc_ref)

    @pl.when(kt == 0)
    def _():
        # Per-(q_tile, head) Q projection (1/sqrt(d_k) folded into Wq), cached
        # in VMEM scratch and reused across every k tile of this head.
        qh_ref[...] = jnp.dot(
            q_ref[0].astype(jnp.bfloat16), wq_ref[h],
            preferred_element_type=jnp.float32).astype(jnp.bfloat16)
        m_ref[...] = jnp.full_like(m_ref, -jnp.inf)
        l_ref[...] = jnp.zeros_like(l_ref)
        ctx_ref[...] = jnp.zeros_like(ctx_ref)

    kh = k_ref[0, 0]                                       # (tk, d_k) bf16
    vh = v_ref[0, 0]                                       # (tk, d_v) bf16

    # scores = (q / sqrt(d_k)) @ k^T via last-dim contraction (no K^T copy).
    s = jax.lax.dot_general(
        qh_ref[...], kh, dimension_numbers=(((1,), (1,)), ((), ())),
        preferred_element_type=jnp.float32)                # (tq, tk) f32

    m_prev = m_ref[...]
    m_new = jnp.maximum(m_prev, jnp.max(s, axis=-1, keepdims=True))
    alpha = jnp.exp(m_prev - m_new)
    p = jnp.exp(s - m_new)
    l_ref[...] = alpha * l_ref[...] + jnp.sum(p, axis=-1, keepdims=True)
    ctx_ref[...] = alpha * ctx_ref[...] + jnp.dot(
        p.astype(jnp.bfloat16), vh, preferred_element_type=jnp.float32)
    m_ref[...] = m_new

    @pl.when(last_k)
    def _():
        # Normalize this head's context and accumulate its slice of the
        # output projection (fc) instead of concatenating head outputs.
        ctx = ctx_ref[...] * (1.0 / l_ref[...])
        acc_ref[...] += jnp.dot(ctx.astype(jnp.bfloat16), wo_ref[h],
                                preferred_element_type=jnp.float32)

    @pl.when(jnp.logical_and(last_k, last_h))
    def _():
        x = acc_ref[...] + q_ref[0]                        # residual, f32
        mean = jnp.mean(x, axis=-1, keepdims=True)
        var = jnp.mean((x - mean) ** 2, axis=-1, keepdims=True)
        y = (x - mean) * jax.lax.rsqrt(var + eps)
        out_ref[0] = y * gamma_ref[...] + beta_ref[...]


# --------------------------------------------------------------------------- #
# Main kernel, attn-returning variant: grid (b, q_tile, head), full-K scores. #
# --------------------------------------------------------------------------- #
def _mha_attn_kernel(q_ref, k_ref, v_ref, wq_ref, wo_ref, gamma_ref, beta_ref,
                     out_ref, attn_ref, acc_ref, *, eps):
    h = pl.program_id(2)

    qh = jnp.dot(q_ref[0].astype(jnp.bfloat16), wq_ref[h],
                 preferred_element_type=jnp.float32)       # (tq, d_k)
    kh = k_ref[0, 0]                                       # (len_k, d_k) bf16
    vh = v_ref[0, 0]                                       # (len_k, d_v) bf16

    s = jax.lax.dot_general(
        qh.astype(jnp.bfloat16), kh, dimension_numbers=(((1,), (1,)), ((), ())),
        preferred_element_type=jnp.float32)                # (tq, len_k) f32

    m = jnp.max(s, axis=-1, keepdims=True)
    e = jnp.exp(s - m)
    inv = 1.0 / jnp.sum(e, axis=-1, keepdims=True)         # exact (torch parity)
    p = e * inv
    attn_ref[0, 0] = p.astype(attn_ref.dtype)              # bf16 writeback

    # TODO(synk): attention dropout / output dropout omitted (eval mode).
    ctx = jnp.dot(p.astype(jnp.bfloat16), vh, preferred_element_type=jnp.float32)
    contrib = jnp.dot(ctx.astype(jnp.bfloat16), wo_ref[h],
                      preferred_element_type=jnp.float32)  # (tq, d_model)

    @pl.when(h == 0)
    def _():
        acc_ref[...] = jnp.zeros_like(acc_ref)

    acc_ref[...] += contrib

    @pl.when(h == pl.num_programs(2) - 1)
    def _():
        x = acc_ref[...] + q_ref[0]
        mean = jnp.mean(x, axis=-1, keepdims=True)
        var = jnp.mean((x - mean) ** 2, axis=-1, keepdims=True)
        y = (x - mean) * jax.lax.rsqrt(var + eps)
        out_ref[0] = y * gamma_ref[...] + beta_ref[...]


# --------------------------------------------------------------------------- #
# Wrapper                                                                      #
# --------------------------------------------------------------------------- #
def multi_head_attention(q, k, v, params, *, n_head, d_k, d_v,
                         return_attn=True, q_tile=None, k_tile=None,
                         attn_dtype=jnp.bfloat16):
    """q,k,v: (batch, seq, d_model) f32. Returns (out, attn) like the PyTorch
    module (attn is None when return_attn=False; attn is bf16 by default to
    halve the S^2 HBM writeback)."""
    sz_b, len_q, d_model = q.shape
    len_k = k.shape[1]
    assert v.shape[1] == len_k

    # ---- host-side weight layout (free) -------------------------------------
    scale = 1.0 / (d_k ** 0.5)
    wq = ((params["w_qs"] * scale)
          .reshape(n_head, d_k, d_model).transpose(0, 2, 1).astype(jnp.bfloat16))
    wk = params["w_ks"].reshape(n_head, d_k, d_model).transpose(0, 2, 1).astype(jnp.bfloat16)
    wv = params["w_vs"].reshape(n_head, d_v, d_model).transpose(0, 2, 1).astype(jnp.bfloat16)
    wo = params["fc"].T.reshape(n_head, d_v, d_model).astype(jnp.bfloat16)
    gamma = params["ln_gamma"].reshape(1, d_model).astype(jnp.float32)
    beta = params["ln_beta"].reshape(1, d_model).astype(jnp.float32)

    # ---- one-shot per-head K/V projections (Pallas prologue) ----------------
    k_heads = _project_per_head(k.astype(jnp.bfloat16), wk)   # (B,H,len_k,d_k)
    v_heads = _project_per_head(v.astype(jnp.bfloat16), wv)   # (B,H,len_k,d_v)

    # ---- tile selection ------------------------------------------------------
    if q_tile is None:
        # keep >=2 total "parallel" iterations when sz_b==1 (v7x megacore).
        target = 256 if sz_b > 1 else 128
        q_tile = len_q
        for cand in (target, 256, 128, 64, 32, 16, 8):
            if cand <= len_q and len_q % cand == 0:
                q_tile = cand
                break
    assert len_q % q_tile == 0, "len_q must be divisible by q_tile"
    nq = len_q // q_tile

    if k_tile is None:
        k_tile = len_k
        for cand in (512, 256, 128):
            if cand < len_k and len_k % cand == 0:
                k_tile = cand
                break
    assert len_k % k_tile == 0, "len_k must be divisible by k_tile"
    nk = len_k // k_tile

    kernel_eps = 1e-6

    # ---- cost estimate / VMEM budget -----------------------------------------
    flops = 2 * sz_b * n_head * (
        len_q * d_model * d_k              # q projection
        + len_q * len_k * d_k              # scores
        + len_q * len_k * d_v              # ctx
        + len_q * d_v * d_model)           # output projection
    transcendentals = sz_b * n_head * len_q * len_k
    bytes_accessed = (sz_b * len_q * d_model * 4 * 2                 # q in + out
                      + sz_b * n_head * len_k * (d_k + d_v) * 2      # K/V heads
                      + n_head * d_model * (d_k + d_v) * 2)          # wq + wo
    if return_attn:
        bytes_accessed += sz_b * n_head * len_q * len_k * jnp.dtype(attn_dtype).itemsize
    cost = pl.CostEstimate(flops=int(flops),
                           transcendentals=int(transcendentals),
                           bytes_accessed=int(bytes_accessed))

    w_bytes = 2 * (n_head * d_model * d_k * 2 + n_head * d_v * d_model * 2)
    qo_bytes = 2 * (q_tile * d_model * 4) * 2
    if return_attn:
        kv_bytes = 2 * len_k * (d_k + d_v) * 2
        attn_bytes = 2 * q_tile * len_k * jnp.dtype(attn_dtype).itemsize
        scratch_bytes = q_tile * d_model * 4
        est = w_bytes + qo_bytes + kv_bytes + attn_bytes + scratch_bytes
    else:
        kv_bytes = 2 * k_tile * (d_k + d_v) * 2
        scratch_bytes = (q_tile * d_model * 4 + 2 * q_tile * 4
                         + q_tile * d_v * 4 + q_tile * d_k * 2)
        est = w_bytes + qo_bytes + kv_bytes + scratch_bytes
    vmem_limit = int(min(max(32 * 2 ** 20, 2 * est), 64 * 2 ** 20))

    # ---- pallas_call ----------------------------------------------------------
    if return_attn:
        kernel = functools.partial(_mha_attn_kernel, eps=kernel_eps)
        grid_spec = pltpu.PrefetchScalarGridSpec(
            num_scalar_prefetch=0,
            grid=(sz_b, nq, n_head),
            in_specs=[
                pl.BlockSpec((1, q_tile, d_model), lambda b, i, h: (b, i, 0)),
                pl.BlockSpec((1, 1, len_k, d_k), lambda b, i, h: (b, h, 0, 0)),
                pl.BlockSpec((1, 1, len_k, d_v), lambda b, i, h: (b, h, 0, 0)),
                pl.BlockSpec((n_head, d_model, d_k), lambda b, i, h: (0, 0, 0)),
                pl.BlockSpec((n_head, d_v, d_model), lambda b, i, h: (0, 0, 0)),
                pl.BlockSpec((1, d_model), lambda b, i, h: (0, 0)),
                pl.BlockSpec((1, d_model), lambda b, i, h: (0, 0)),
            ],
            out_specs=[
                pl.BlockSpec((1, q_tile, d_model), lambda b, i, h: (b, i, 0)),
                pl.BlockSpec((1, 1, q_tile, len_k), lambda b, i, h: (b, h, i, 0)),
            ],
            scratch_shapes=[pltpu.VMEM((q_tile, d_model), jnp.float32)],
        )
        out, attn = pl.pallas_call(
            kernel,
            out_shape=[jax.ShapeDtypeStruct((sz_b, len_q, d_model), jnp.float32),
                       jax.ShapeDtypeStruct((sz_b, n_head, len_q, len_k), attn_dtype)],
            grid_spec=grid_spec,
            compiler_params=pltpu.CompilerParams(
                dimension_semantics=("parallel", "parallel", "arbitrary"),
                vmem_limit_bytes=vmem_limit),
            cost_estimate=cost,
        )(q, k_heads, v_heads, wq, wo, gamma, beta)
        return out, attn

    kernel = functools.partial(_mha_flash_kernel, eps=kernel_eps)
    grid_spec = pltpu.PrefetchScalarGridSpec(
        num_scalar_prefetch=0,
        grid=(sz_b, nq, n_head, nk),
        in_specs=[
            pl.BlockSpec((1, q_tile, d_model), lambda b, i, h, kt: (b, i, 0)),
            pl.BlockSpec((1, 1, k_tile, d_k), lambda b, i, h, kt: (b, h, kt, 0)),
            pl.BlockSpec((1, 1, k_tile, d_v), lambda b, i, h, kt: (b, h, kt, 0)),
            pl.BlockSpec((n_head, d_model, d_k), lambda b, i, h, kt: (0, 0, 0)),
            pl.BlockSpec((n_head, d_v, d_model), lambda b, i, h, kt: (0, 0, 0)),
            pl.BlockSpec((1, d_model), lambda b, i, h, kt: (0, 0)),
            pl.BlockSpec((1, d_model), lambda b, i, h, kt: (0, 0)),
        ],
        out_specs=pl.BlockSpec((1, q_tile, d_model), lambda b, i, h, kt: (b, i, 0)),
        scratch_shapes=[
            pltpu.VMEM((q_tile, d_model), jnp.float32),   # acc over heads
            pltpu.VMEM((q_tile, 1), jnp.float32),         # m (online softmax)
            pltpu.VMEM((q_tile, 1), jnp.float32),         # l
            pltpu.VMEM((q_tile, d_v), jnp.float32),       # ctx
            pltpu.VMEM((q_tile, d_k), jnp.bfloat16),      # cached q projection
        ],
    )
    out = pl.pallas_call(
        kernel,
        out_shape=jax.ShapeDtypeStruct((sz_b, len_q, d_model), jnp.float32),
        grid_spec=grid_spec,
        compiler_params=pltpu.CompilerParams(
            dimension_semantics=("parallel", "parallel", "arbitrary", "arbitrary"),
            vmem_limit_bytes=vmem_limit),
        cost_estimate=cost,
    )(q, k_heads, v_heads, wq, wo, gamma, beta)
    return out, None


# --------------------------------------------------------------------------- #
# Plain-JAX f32 reference mirroring the PyTorch forward (eval, mask=None).    #
# --------------------------------------------------------------------------- #
def reference_mha(q, k, v, params, *, n_head, d_k, d_v):
    sz_b, len_q, d_model = q.shape
    residual = q
    qp = (q @ params["w_qs"].T).reshape(sz_b, len_q, n_head, d_k).transpose(0, 2, 1, 3)
    kp = (k @ params["w_ks"].T).reshape(sz_b, -1, n_head, d_k).transpose(0, 2, 1, 3)
    vp = (v @ params["w_vs"].T).reshape(sz_b, -1, n_head, d_v).transpose(0, 2, 1, 3)
    scores = jnp.einsum("bhqd,bhkd->bhqk", qp / (d_k ** 0.5), kp)
    attn = jax.nn.softmax(scores, axis=-1)
    o = jnp.einsum("bhqk,bhkd->bhqd", attn, vp)
    o = o.transpose(0, 2, 1, 3).reshape(sz_b, len_q, n_head * d_v)
    o = o @ params["fc"].T + residual
    mean = o.mean(-1, keepdims=True)
    var = ((o - mean) ** 2).mean(-1, keepdims=True)
    o = (o - mean) / jnp.sqrt(var + 1e-6) * params["ln_gamma"] + params["ln_beta"]
    return o, attn


if __name__ == "__main__":
    # Small but layout-realistic shapes: lane-aligned d_model, seq that
    # actually exercises q- and k-tiling in both kernel variants.
    n_head, d_model, d_k, d_v = 4, 128, 32, 32
    sz_b, seq = 2, 256

    key = jax.random.PRNGKey(0)
    ks = jax.random.split(key, 8)
    params = {
        "w_qs": jax.random.normal(ks[0], (n_head * d_k, d_model), jnp.float32) * 0.1,
        "w_ks": jax.random.normal(ks[1], (n_head * d_k, d_model), jnp.float32) * 0.1,
        "w_vs": jax.random.normal(ks[2], (n_head * d_v, d_model), jnp.float32) * 0.1,
        "fc":   jax.random.normal(ks[3], (d_model, n_head * d_v), jnp.float32) * 0.1,
        "ln_gamma": jnp.ones((d_model,), jnp.float32),
        "ln_beta":  jnp.zeros((d_model,), jnp.float32),
    }
    q = jax.random.normal(ks[4], (sz_b, seq, d_model), jnp.float32)
    k = jax.random.normal(ks[5], (sz_b, seq, d_model), jnp.float32)
    v = jax.random.normal(ks[6], (sz_b, seq, d_model), jnp.float32)

    ref_out, ref_attn = reference_mha(q, k, v, params, n_head=n_head, d_k=d_k, d_v=d_v)

    # Path 1: module-parity path (returns attention probabilities, bf16).
    out, attn = multi_head_attention(q, k, v, params, n_head=n_head, d_k=d_k,
                                     d_v=d_v, return_attn=True)
    out, attn = jax.block_until_ready((out, attn))
    assert out.shape == (sz_b, seq, d_model)
    assert attn.shape == (sz_b, n_head, seq, seq)
    assert jnp.allclose(out, ref_out, atol=5e-2, rtol=5e-2), (
        float(jnp.max(jnp.abs(out - ref_out))))
    assert jnp.allclose(attn.astype(jnp.float32), ref_attn, atol=2e-2, rtol=2e-2), (
        float(jnp.max(jnp.abs(attn.astype(jnp.float32) - ref_attn))))

    # Path 2: flash-style fast path (no attention-probability writeback),
    # explicitly exercising q- and k-tiling plus online softmax.
    out_only, no_attn = multi_head_attention(q, k, v, params, n_head=n_head,
                                             d_k=d_k, d_v=d_v, return_attn=False,
                                             q_tile=128, k_tile=128)
    out_only = jax.block_until_ready(out_only)
    assert no_attn is None
    assert jnp.allclose(out_only, ref_out, atol=5e-2, rtol=5e-2), (
        float(jnp.max(jnp.abs(out_only - ref_out))))

    print("KERNEL_OK")
</pallas_src>

<mosaic_0001>
module attributes {stable_mosaic.version = 11 : i64} {
  func.func @_kv_proj_kernel(%arg0: i32, %arg1: i32, %arg2: memref<1x256x128xbf16, #tpu.memory_space<vmem>>, %arg3: memref<4x128x32xbf16, #tpu.memory_space<vmem>>, %arg4: memref<1x1x256x32xbf16, #tpu.memory_space<vmem>>) attributes {dimension_semantics = [#tpu.dimension_semantics<parallel>, #tpu.dimension_semantics<parallel>], iteration_bounds = array<i64: 2, 4>, scalar_prefetch = 0 : i64, scratch_operands = 0 : i64, tpu.core_type = #tpu.core_type<tc>, window_params = [{transform_indices = @transform_0, window_bounds = array<i64: 1, 256, 128>}, {pipeline_mode = #tpu.pipeline_mode<synchronous>, transform_indices = @transform_1, window_bounds = array<i64: 4, 128, 32>}, {transform_indices = @transform_2, window_bounds = array<i64: 1, 1, 256, 32>}]} {
    %c0 = arith.constant 0 : index
    %c0_0 = arith.constant 0 : index
    %c0_1 = arith.constant 0 : index
    %0 = vector.load %arg2[%c0, %c0_0, %c0_1] : memref<1x256x128xbf16, #tpu.memory_space<vmem>>, vector<1x256x128xbf16>
    %1 = vector.shape_cast %0 : vector<1x256x128xbf16> to vector<256x128xbf16>
    %2 = arith.index_cast %arg1 : i32 to index
    %c0_2 = arith.constant 0 : index
    %c0_3 = arith.constant 0 : index
    %3 = vector.load %arg3[%2, %c0_2, %c0_3] : memref<4x128x32xbf16, #tpu.memory_space<vmem>>, vector<1x128x32xbf16>
    %4 = vector.shape_cast %3 : vector<1x128x32xbf16> to vector<128x32xbf16>
    %cst = arith.constant dense<0.000000e+00> : vector<256x32xf32>
    %5 = tpu.matmul %1, %4, %cst {dimension_numbers = #tpu.dot_dimension_numbers<[1], [0], [0], [1], [0, 0, 1, 1], [], []>} : vector<256x128xbf16>, vector<128x32xbf16>, vector<256x32xf32> -> vector<256x32xf32>
    %6 = arith.truncf %5 : vector<256x32xf32> to vector<256x32xbf16>
    %c0_4 = arith.constant 0 : index
    %c0_5 = arith.constant 0 : index
    %c0_6 = arith.constant 0 : index
    %c0_7 = arith.constant 0 : index
    %7 = vector.load %arg4[%c0_4, %c0_5, %c0_6, %c0_7] : memref<1x1x256x32xbf16, #tpu.memory_space<vmem>>, vector<1x1x256x32xbf16>
    %8 = vector.shape_cast %7 : vector<1x1x256x32xbf16> to vector<256x32xbf16>
    %9 = vector.shape_cast %6 : vector<256x32xbf16> to vector<1x1x256x32xbf16>
    tpu.vector_store %arg4[%c0_4, %c0_5, %c0_6, %c0_7], %9 {strides = array<i32>} : memref<1x1x256x32xbf16, #tpu.memory_space<vmem>>, vector<1x1x256x32xbf16>,
    return
  }
  func.func @transform_0(%arg0: i32, %arg1: i32) -> (i32, i32, i32) {
    %c0_i32 = arith.constant 0 : i32
    %c0_i32_0 = arith.constant 0 : i32
    %c0_i32_1 = arith.constant 0 : i32
    return %arg0, %c0_i32, %c0_i32_0 : i32, i32, i32
  }
  func.func @transform_1(%arg0: i32, %arg1: i32) -> (i32, i32, i32) {
    %c0_i32 = arith.constant 0 : i32
    %c0_i32_0 = arith.constant 0 : i32
    %c0_i32_1 = arith.constant 0 : i32
    %c0_i32_2 = arith.constant 0 : i32
    return %c0_i32, %c0_i32_0, %c0_i32_1 : i32, i32, i32
  }
  func.func @transform_2(%arg0: i32, %arg1: i32) -> (i32, i32, i32, i32) {
    %c0_i32 = arith.constant 0 : i32
    %c0_i32_0 = arith.constant 0 : i32
    %c0_i32_1 = arith.constant 0 : i32
    return %arg0, %arg1, %c0_i32, %c0_i32_0 : i32, i32, i32, i32
  }
}

</mosaic_0001>

<llo_original>
// kernel: tpu_custom_call.1
$region0: #{tpu_custom_call.1}
  #allocation0 [shape = 'u32[]', space=smem, size = 0x4, offset = 0x4, fixed_abs, tag = 'smem constant byte address 0x4 - core index']
  #allocation1 [shape = 'u32[144,128]{1,0:T(1,128)}', space=vmem, size = 0x12000, scoped, tag = 'internal scratch']
  %s0 = inlined_call_operand.vmem [shape: bf16[2,256,128], index: 0, kind: input, shape index: {}]
  %s1 = inlined_call_operand.vmem [shape: bf16[4,128,32], index: 1, kind: input, shape index: {}]
  %s2 = inlined_call_operand.vmem [shape: bf16[2,4,256,32], index: 2, kind: output, shape index: {}]
  %s3 = sld [smem:[#allocation0]]
  $region41: #{tpu_custom_call.1} parent=0
    _
  %s5 = ssub.s32 1, %s3
  %s6 = scalar_select 0, %s5, %s3
  loop: start=0, step=1, limit=10
  $region2: #{tpu_custom_call.1} parent=0 // loop_pre_header
    _
  $region3: #{tpu_custom_call.1} parent=0 // loop_header
    %s8 = sphi 0, %s12
    %p9 = scmp.ge.s32.totalorder %s8, 10
    %s15 = sphi 0, %s27
    %s16 = sphi 0, %s23
    %s17 = sphi 0, %s15
    %s18 = sphi 0, %s16
    %s19 = sphi 0, %s17
    %s20 = sphi 0, %s18
    %s30 = sphi 0, %s32
    %s33 = sphi 0, %s30
    %s34 = sphi 0, %s33
    %s50 = sphi 0, %s34
    %s54 = sphi 0, %s54
    %s56 = sphi 0, %s54
    %s57 = sphi 0, %s56
    %s71 = sphi 0, %s57
    %s79 = sphi 0, %s81
    %s82 = sphi 0, %s79
    %s83 = sphi 0, %s82
    %s99 = sphi 0, %s83
  $region4: #{tpu_custom_call.1} parent=0 // loop_header_branch
    %11 = sbr.rel (%p9) target = $region8
  $region5: #{tpu_custom_call.1} parent=0 // loop_body
    %s13 = ssub.s32 %s8, 1
    %s14 = ssub.s32 %s8, 2
    %s21 = sadd.s32 1, %s16
    %p22 = scmp.ge.s32.totalorder %s21, 4
    %s23 = scalar_select %p22, 0, %s21
    %s24 = sadd.s32 1, %s15
    %s25 = scalar_select %p22, %s24, %s15
    %p26 = scmp.ge.s32.totalorder %s25, 2
    %s27 = scalar_select %p26, 0, %s25
    %s28 = ssub.s32 %s15, %s27
    %p29 = scmp.eq.s32.totalorder %s28, 0
    %s31 = sadd.s32 %s30, 1
    %s32 = scalar_select %p29, %s30, %s31
    %p35 = pneg %p29
    %p36 = scmp.eq.s32.totalorder %s8, 7
    %p37 = por %p35, %p36
    %p38 = scmp.ne.s32.totalorder %s30, %s33
    %p39 = scmp.eq.s32.totalorder %s8, 0
    %p40 = por %p38, %p39
    %p41 = scmp.ne.s32.totalorder %s30, %s33
    %p42 = scmp.eq.s32.totalorder %s13, 7
    %p43 = por %p41, %p42
    %p44 = scmp.ne.s32.totalorder %s33, %s34
    %p45 = scmp.eq.s32.totalorder %s13, 0
    %p46 = por %p44, %p45
    %p47 = scmp.ne.s32.totalorder %s33, %s34
    %p48 = scmp.eq.s32.totalorder %s14, 7
    %p49 = por %p47, %p48
    %p51 = scmp.ne.s32.totalorder %s34, %s50
    %p52 = scmp.eq.s32.totalorder %s14, 0
    %p53 = por %p51, %p52
    %s55 = sadd.s32 %s54, 1
    %p58 = scmp.eq.s32.totalorder %s8, 7
    %p59 = scmp.ne.s32.totalorder %s54, %s56
    %p60 = scmp.eq.s32.totalorder %s8, 0
    %p61 = por %p59, %p60
    %p62 = scmp.ne.s32.totalorder %s54, %s56
    %p63 = scmp.eq.s32.totalorder %s13, 7
    %p64 = por %p62, %p63
    %p65 = scmp.ne.s32.totalorder %s56, %s57
    %p66 = scmp.eq.s32.totalorder %s13, 0
    %p67 = por %p65, %p66
    %p68 = scmp.ne.s32.totalorder %s56, %s57
    %p69 = scmp.eq.s32.totalorder %s14, 7
    %p70 = por %p68, %p69
    %p72 = scmp.ne.s32.totalorder %s57, %s71
    %p73 = scmp.eq.s32.totalorder %s14, 0
    %p74 = por %p72, %p73
    %s75 = ssub.s32 %s15, %s27
    %s76 = ssub.s32 %s16, %s23
    %s77 = sor.u32 %s75, %s76
    %p78 = scmp.eq.s32.totalorder %s77, 0
    %s80 = sadd.s32 %s79, 1
    %s81 = scalar_select %p78, %s79, %s80
    %p84 = pneg %p78
    %p85 = scmp.eq.s32.totalorder %s8, 7
    %p86 = por %p84, %p85
    %p87 = scmp.ne.s32.totalorder %s79, %s82
    %p88 = scmp.eq.s32.totalorder %s8, 0
    %p89 = por %p87, %p88
    %p90 = scmp.ne.s32.totalorder %s79, %s82
    %p91 = scmp.eq.s32.totalorder %s13, 7
    %p92 = por %p90, %p91
    %p93 = scmp.ne.s32.totalorder %s82, %s83
    %p94 = scmp.eq.s32.totalorder %s13, 0
    %p95 = por %p93, %p94
    %p96 = scmp.ne.s32.totalorder %s82, %s83
    %p97 = scmp.eq.s32.totalorder %s14, 7
    %p98 = por %p96, %p97
    %p100 = scmp.ne.s32.totalorder %s83, %s99
    %p101 = scmp.eq.s32.totalorder %s14, 0
    %p102 = por %p100, %p101
    %p103 = scmp.le.s32.totalorder 1, %s8
    %p104 = scmp.lt.s32.totalorder %s8, 9
    %p105 = pnand %p103, %p104
    %p106 = pneg %p105
    // Predicated region
    $region9: #{tpu_custom_call.1} parent=5 // pred_check
      _
    $region10: #{tpu_custom_call.1} parent=5 // pred_check_branch
      %108 = sbr.rel (%p105) target = $region12
    $region11: #{tpu_custom_call.1} parent=5 // pred_region
      %s109 = ssub.s32 %s8, 1
      // Predicated region
      $region13: #{tpu_custom_call.1} parent=11 // pred_check
        %p110 = pneg %p67
      $region14: #{tpu_custom_call.1} parent=11 // pred_check_branch
        %112 = sbr.rel (%p110) target = $region16
      $region15: #{tpu_custom_call.1} parent=11 // pred_region
        _
      $region16: #{tpu_custom_call.1} parent=11 // pred_fallthru
        _
    $region12: #{tpu_custom_call.1} parent=5 // pred_fallthru
      _
    %p113 = scmp.lt.s32.totalorder %s8, 8
    // Predicated region
    $region17: #{tpu_custom_call.1} parent=5 // pred_check
      %p114 = pneg %p113
    $region18: #{tpu_custom_call.1} parent=5 // pred_check_branch
      %116 = sbr.rel (%p114) target = $region20
    $region19: #{tpu_custom_call.1} parent=5 // pred_region
      // Predicated region
      $region21: #{tpu_custom_call.1} parent=19 // pred_check
        %p117 = pneg %p40
      $region22: #{tpu_custom_call.1} parent=19 // pred_check_branch
        %119 = sbr.rel (%p117) target = $region24
      $region23: #{tpu_custom_call.1} parent=19 // pred_region
        %p120 = scmp.lt.s32.totalorder %s15, 1
        %s121 = scalar_select %p120, %s15, 1
        %s122 = smul.addr %s121, 32
        %s123 = smul.addr %s122, 4
        %s124 = scalar_lea.vmem %s0, %s123
      $region24: #{tpu_custom_call.1} parent=19 // pred_fallthru
        _
    $region20: #{tpu_custom_call.1} parent=5 // pred_fallthru
      _
    %p125 = scmp.le.s32.totalorder 1, %s8
    %p126 = scmp.lt.s32.totalorder %s8, 9
    %p127 = pnand %p125, %p126
    %p128 = pneg %p127
    // Predicated region
    $region25: #{tpu_custom_call.1} parent=5 // pred_check
      _
    $region26: #{tpu_custom_call.1} parent=5 // pred_check_branch
      %130 = sbr.rel (%p127) target = $region28
    $region27: #{tpu_custom_call.1} parent=5 // pred_region
      %s131 = ssub.s32 %s8, 1
      %p132 = scmp.lt.s32.totalorder %s17, 1
      %s133 = scalar_select %p132, %s17, 1
      %s134 = smul.addr %s133, 32
      %s135 = smul.addr %s134, 4
      %s136 = scalar_lea.vmem %s0, %s135
      %p137 = pneg %p46
      %p138 = pneg %p43
      %p139 = pneg %p67
      %p140 = pneg %p64
      %p141 = pneg %p95
      %p142 = pneg %p92
      %p143 = scmp.lt.s32.totalorder %s17, 1
      %s144 = scalar_select %p143, %s17, 1
      %p145 = scmp.lt.s32.totalorder %s18, 3
      %s146 = scalar_select %p145, %s18, 3
      %s147 = smul.addr %s146, 32
      %s148 = smul.addr %s144, 128
      %s149 = sadd.s32 %s147, %s148
      %s150 = smul.addr %s149, 4
      %s151 = scalar_lea.vmem %s2, %s150
      %p152 = scmp.lt.s32.totalorder %s17, 1
      %s153 = scalar_select %p152, %s17, 1
      %s154 = smul.addr %s153, 32
      %s155 = smul.addr %s154, 4
      %s156 = scalar_lea.vmem %s0, %s155
      %p157 = scmp.lt.s32.totalorder %s17, 1
      %s158 = scalar_select %p157, %s17, 1
      %p159 = scmp.lt.s32.totalorder %s18, 3
      %s160 = scalar_select %p159, %s18, 3
      %s161 = smul.addr %s160, 32
      %s162 = smul.addr %s158, 128
      %s163 = sadd.s32 %s161, %s162
      %s164 = smul.addr %s163, 4
      %s165 = scalar_lea.vmem %s2, %s164
      %v167 = vld [vmem:[%s156] sm:$0xf]
      %v168 = vld [vmem:[%s156 + $0x4] sm:$0xf]
      %v169 = vld [vmem:[%s156 + $0x8] sm:$0xf]
      %v170 = vld [vmem:[%s156 + $0xc] sm:$0xf]
      %v171 = vld [vmem:[%s156 + $0x10] sm:$0xf]
      %v172 = vld [vmem:[%s156 + $0x14] sm:$0xf]
      %v173 = vld [vmem:[%s156 + $0x18] sm:$0xf]
      %v174 = vld [vmem:[%s156 + $0x1c] sm:$0xf]
      %v175 = vld [vmem:[%s156 + $0x20] sm:$0xf]
      %v176 = vld [vmem:[%s156 + $0x24] sm:$0xf]
      %v177 = vld [vmem:[%s156 + $0x28] sm:$0xf]
      %v178 = vld [vmem:[%s156 + $0x2c] sm:$0xf]
      %v179 = vld [vmem:[%s156 + $0x30] sm:$0xf]
      %v180 = vld [vmem:[%s156 + $0x34] sm:$0xf]
      %v181 = vld [vmem:[%s156 + $0x38] sm:$0xf]
      %v182 = vld [vmem:[%s156 + $0x3c] sm:$0xf]
      %v183 = vld [vmem:[%s156 + $0x40] sm:$0xf]
      %v184 = vld [vmem:[%s156 + $0x44] sm:$0xf]
      %v185 = vld [vmem:[%s156 + $0x48] sm:$0xf]
      %v186 = vld [vmem:[%s156 + $0x4c] sm:$0xf]
      %v187 = vld [vmem:[%s156 + $0x50] sm:$0xf]
      %v188 = vld [vmem:[%s156 + $0x54] sm:$0xf]
      %v189 = vld [vmem:[%s156 + $0x58] sm:$0xf]
      %v190 = vld [vmem:[%s156 + $0x5c] sm:$0xf]
      %v191 = vld [vmem:[%s156 + $0x60] sm:$0xf]
      %v192 = vld [vmem:[%s156 + $0x64] sm:$0xf]
      %v193 = vld [vmem:[%s156 + $0x68] sm:$0xf]
      %v194 = vld [vmem:[%s156 + $0x6c] sm:$0xf]
      %v195 = vld [vmem:[%s156 + $0x70] sm:$0xf]
      %v196 = vld [vmem:[%s156 + $0x74] sm:$0xf]
      %v197 = vld [vmem:[%s156 + $0x78] sm:$0xf]
      %v198 = vld [vmem:[%s156 + $0x7c] sm:$0xf]
      %s199 = smul.u32 %s18, 16
      %s200 = smul.addr %s199, 4
      %s201 = scalar_lea.vmem %s1, %s200
      %v202 = vld [vmem:[%s201] sm:$0xf]
      %v203 = vld [vmem:[%s201 + $0x4] sm:$0xf]
      %v204 = vld [vmem:[%s201 + $0x8] sm:$0xf]
      %v205 = vld [vmem:[%s201 + $0xc] sm:$0xf]
      %v206 = vld [vmem:[%s201 + $0x10] sm:$0xf]
      %v207 = vld [vmem:[%s201 + $0x14] sm:$0xf]
      %v208 = vld [vmem:[%s201 + $0x18] sm:$0xf]
      %v209 = vld [vmem:[%s201 + $0x1c] sm:$0xf]
      %v210 = vld [vmem:[%s201 + $0x20] sm:$0xf]
      %v211 = vld [vmem:[%s201 + $0x24] sm:$0xf]
      %v212 = vld [vmem:[%s201 + $0x28] sm:$0xf]
      %v213 = vld [vmem:[%s201 + $0x2c] sm:$0xf]
      %v214 = vld [vmem:[%s201 + $0x30] sm:$0xf]
      %v215 = vld [vmem:[%s201 + $0x34] sm:$0xf]
      %v216 = vld [vmem:[%s201 + $0x38] sm:$0xf]
      %v217 = vld [vmem:[%s201 + $0x3c] sm:$0xf]
      %v250 = vunpack.c.l.b16 %v167
      %v251 = vunpack.c.l.b16 %v168
      %v252 = vunpack.c.l.b16 %v169
      %v253 = vunpack.c.l.b16 %v170
      %v254 = vunpack.c.l.b16 %v171
      %v255 = vunpack.c.l.b16 %v172
      %v256 = vunpack.c.l.b16 %v173
      %v257 = vunpack.c.l.b16 %v174
      %v258 = vunpack.c.l.b16 %v175
      %v259 = vunpack.c.l.b16 %v176
      %v260 = vunpack.c.l.b16 %v177
      %v261 = vunpack.c.l.b16 %v178
      %v262 = vunpack.c.l.b16 %v179
      %v263 = vunpack.c.l.b16 %v180
      %v264 = vunpack.c.l.b16 %v181
      %v265 = vunpack.c.l.b16 %v182
      %v266 = vunpack.c.l.b16 %v183
      %v267 = vunpack.c.l.b16 %v184
      %v268 = vunpack.c.l.b16 %v185
      %v269 = vunpack.c.l.b16 %v186
      %v270 = vunpack.c.l.b16 %v187
      %v271 = vunpack.c.l.b16 %v188
      %v272 = vunpack.c.l.b16 %v189
      %v273 = vunpack.c.l.b16 %v190
      %v274 = vunpack.c.l.b16 %v191
      %v275 = vunpack.c.l.b16 %v192
      %v276 = vunpack.c.l.b16 %v193
      %v277 = vunpack.c.l.b16 %v194
      %v278 = vunpack.c.l.b16 %v195
      %v279 = vunpack.c.l.b16 %v196
      %v280 = vunpack.c.l.b16 %v197
      %v281 = vunpack.c.l.b16 %v198
      %v282 = vpack.c.b16 %v251, %v250
      %v283 = vpack.c.b16 %v253, %v252
      %v284 = vpack.c.b16 %v255, %v254
      %v285 = vpack.c.b16 %v257, %v256
      %v286 = vpack.c.b16 %v259, %v258
      %v287 = vpack.c.b16 %v261, %v260
      %v288 = vpack.c.b16 %v263, %v262
      %v289 = vpack.c.b16 %v265, %v264
      %v290 = vpack.c.b16 %v267, %v266
      %v291 = vpack.c.b16 %v269, %v268
      %v292 = vpack.c.b16 %v271, %v270
      %v293 = vpack.c.b16 %v273, %v272
      %v294 = vpack.c.b16 %v275, %v274
      %v295 = vpack.c.b16 %v277, %v276
      %v296 = vpack.c.b16 %v279, %v278
      %v297 = vpack.c.b16 %v281, %v280
      %v330 = vunpack.c.l.b16 %v202
      %v331 = vunpack.c.l.b16 %v203
      %v332 = vunpack.c.l.b16 %v204
      %v333 = vunpack.c.l.b16 %v205
      %v334 = vunpack.c.l.b16 %v206
      %v335 = vunpack.c.l.b16 %v207
      %v336 = vunpack.c.l.b16 %v208
      %v337 = vunpack.c.l.b16 %v209
      %v338 = vunpack.c.l.b16 %v210
      %v339 = vunpack.c.l.b16 %v211
      %v340 = vunpack.c.l.b16 %v212
      %v341 = vunpack.c.l.b16 %v213
      %v342 = vunpack.c.l.b16 %v214
      %v343 = vunpack.c.l.b16 %v215
      %v344 = vunpack.c.l.b16 %v216
      %v345 = vunpack.c.l.b16 %v217
      %v346 = vpack.c.b16 %v331, %v330
      %v347 = vpack.c.b16 %v333, %v332
      %v348 = vpack.c.b16 %v335, %v334
      %v349 = vpack.c.b16 %v337, %v336
      %v350 = vpack.c.b16 %v339, %v338
      %v351 = vpack.c.b16 %v341, %v340
      %v352 = vpack.c.b16 %v343, %v342
      %v353 = vpack.c.b16 %v345, %v344
      %362 = vmatprep.subr.bf16.mxu0 0
      %363 = vmatpush1.bf16.msra.mxu0 %v346
      %364 = vmatprep.subr.bf16.mxu0 0
      %365 = vmatpush1.bf16.msra.mxu0 %v347
      %366 = vmatprep.subr.bf16.mxu0 0
      %367 = vmatpush1.bf16.msra.mxu0 %v348
      %368 = vmatprep.subr.bf16.mxu0 0
      %369 = vmatpush1.bf16.msra.mxu0 %v349
      %370 = vmatprep.subr.bf16.mxu0 0
      %371 = vmatpush1.bf16.msra.mxu0 %v350
      %372 = vmatprep.subr.bf16.mxu0 0
      %373 = vmatpush1.bf16.msra.mxu0 %v351
      %374 = vmatprep.subr.bf16.mxu0 0
      %375 = vmatpush1.bf16.msra.mxu0 %v352
      %376 = vmatprep.subr.bf16.mxu0 0
      %377 = vmatpush1.bf16.msra.mxu0 %v353
      %378 = vmatprep.subr.bf16.mxu0 0
      %379 = vmatpush1.bf16.msra.mxu0 0
      %380 = vmatprep.subr.bf16.mxu0 0
      %381 = vmatpush1.bf16.msra.mxu0 0
      %382 = vmatprep.subr.bf16.mxu0 0
      %383 = vmatpush1.bf16.msra.mxu0 0
      %384 = vmatprep.subr.bf16.mxu0 0
      %385 = vmatpush1.bf16.msra.mxu0 0
      %386 = vmatprep.subr.bf16.mxu0 0
      %387 = vmatpush1.bf16.msra.mxu0 0
      %388 = vmatprep.subr.bf16.mxu0 0
      %389 = vmatpush1.bf16.msra.mxu0 0
      %390 = vmatprep.subr.bf16.mxu0 0
      %391 = vmatpush1.bf16.msra.mxu0 0
      %392 = vmatprep.subr.bf16.mxu0 0
      %393 = vmatpush1.bf16.msra.mxu0 0
      %394 = vmatprep.mubr.bf16.mxu0 0
      %395 = vmatmul.mubr.bf16.gmra.mrb[0].mxu0 %v282
      %v396 = vpop.f32.mrb[0].mxu0
      %v397 = vadd.f32 0.0, %v396
      %v398 = vpop.f32.mrb[0].mxu0
      %v399 = vpop.f32.mrb[0].mxu0
      %v400 = vadd.f32 0.0, %v399
      %v401 = vpop.f32.mrb[0].mxu0
      %402 = vmatprep.mubr.bf16.mxu0 0
      %403 = vmatmul.mubr.bf16.gmra.mrb[0].mxu0 %v283
      %v404 = vpop.f32.mrb[0].mxu0
      %v405 = vadd.f32 0.0, %v404
      %v406 = vpop.f32.mrb[0].mxu0
      %v407 = vpop.f32.mrb[0].mxu0
      %v408 = vadd.f32 0.0, %v407
      %v409 = vpop.f32.mrb[0].mxu0
      %410 = vmatprep.mubr.bf16.mxu0 0
      %411 = vmatmul.mubr.bf16.gmra.mrb[0].mxu0 %v284
      %v412 = vpop.f32.mrb[0].mxu0
      %v413 = vadd.f32 0.0, %v412
      %v414 = vpop.f32.mrb[0].mxu0
      %v415 = vpop.f32.mrb[0].mxu0
      %v416 = vadd.f32 0.0, %v415
      %v417 = vpop.f32.mrb[0].mxu0
      %418 = vmatprep.mubr.bf16.mxu0 0
      %419 = vmatmul.mubr.bf16.gmra.mrb[0].mxu0 %v285
      %v420 = vpop.f32.mrb[0].mxu0
      %v421 = vadd.f32 0.0, %v420
      %v422 = vpop.f32.mrb[0].mxu0
      %v423 = vpop.f32.mrb[0].mxu0
      %v424 = vadd.f32 0.0, %v423
      %v425 = vpop.f32.mrb[0].mxu0
      %426 = vmatprep.mubr.bf16.mxu0 0
      %427 = vmatmul.mubr.bf16.gmra.mrb[0].mxu0 %v286
      %v428 = vpop.f32.mrb[0].mxu0
      %v429 = vadd.f32 0.0, %v428
      %v430 = vpop.f32.mrb[0].mxu0
      %v431 = vpop.f32.mrb[0].mxu0
      %v432 = vadd.f32 0.0, %v431
      %v433 = vpop.f32.mrb[0].mxu0
      %434 = vmatprep.mubr.bf16.mxu0 0
      %435 = vmatmul.mubr.bf16.gmra.mrb[0].mxu0 %v287
      %v436 = vpop.f32.mrb[0].mxu0
      %v437 = vadd.f32 0.0, %v436
      %v438 = vpop.f32.mrb[0].mxu0
      %v439 = vpop.f32.mrb[0].mxu0
      %v440 = vadd.f32 0.0, %v439
      %v441 = vpop.f32.mrb[0].mxu0
      %442 = vmatprep.mubr.bf16.mxu0 0
      %443 = vmatmul.mubr.bf16.gmra.mrb[0].mxu0 %v288
      %v444 = vpop.f32.mrb[0].mxu0
      %v445 = vadd.f32 0.0, %v444
      %v446 = vpop.f32.mrb[0].mxu0
      %v447 = vpop.f32.mrb[0].mxu0
      %v448 = vadd.f32 0.0, %v447
      %v449 = vpop.f32.mrb[0].mxu0
      %450 = vmatprep.mubr.bf16.mxu0 0
      %451 = vmatmul.mubr.bf16.gmra.mrb[0].mxu0 %v289
      %v452 = vpop.f32.mrb[0].mxu0
      %v453 = vadd.f32 0.0, %v452
      %v454 = vpop.f32.mrb[0].mxu0
      %v455 = vpop.f32.mrb[0].mxu0
      %v456 = vadd.f32 0.0, %v455
      %v457 = vpop.f32.mrb[0].mxu0
      %458 = vmatprep.mubr.bf16.mxu0 0
      %459 = vmatmul.mubr.bf16.gmra.mrb[0].mxu0 %v290
      %v460 = vpop.f32.mrb[0].mxu0
      %v461 = vadd.f32 0.0, %v460
      %v462 = vpop.f32.mrb[0].mxu0
      %v463 = vpop.f32.mrb[0].mxu0
      %v464 = vadd.f32 0.0, %v463
      %v465 = vpop.f32.mrb[0].mxu0
      %466 = vmatprep.mubr.bf16.mxu0 0
      %467 = vmatmul.mubr.bf16.gmra.mrb[0].mxu0 %v291
      %v468 = vpop.f32.mrb[0].mxu0
      %v469 = vadd.f32 0.0, %v468
      %v470 = vpop.f32.mrb[0].mxu0
      %v471 = vpop.f32.mrb[0].mxu0
      %v472 = vadd.f32 0.0, %v471
      %v473 = vpop.f32.mrb[0].mxu0
      %474 = vmatprep.mubr.bf16.mxu0 0
      %475 = vmatmul.mubr.bf16.gmra.mrb[0].mxu0 %v292
      %v476 = vpop.f32.mrb[0].mxu0
      %v477 = vadd.f32 0.0, %v476
      %v478 = vpop.f32.mrb[0].mxu0
      %v479 = vpop.f32.mrb[0].mxu0
      %v480 = vadd.f32 0.0, %v479
      %v481 = vpop.f32.mrb[0].mxu0
      %482 = vmatprep.mubr.bf16.mxu0 0
      %483 = vmatmul.mubr.bf16.gmra.mrb[0].mxu0 %v293
      %v484 = vpop.f32.mrb[0].mxu0
      %v485 = vadd.f32 0.0, %v484
      %v486 = vpop.f32.mrb[0].mxu0
      %v487 = vpop.f32.mrb[0].mxu0
      %v488 = vadd.f32 0.0, %v487
      %v489 = vpop.f32.mrb[0].mxu0
      %490 = vmatprep.mubr.bf16.mxu0 0
      %491 = vmatmul.mubr.bf16.gmra.mrb[0].mxu0 %v294
      %v492 = vpop.f32.mrb[0].mxu0
      %v493 = vadd.f32 0.0, %v492
      %v494 = vpop.f32.mrb[0].mxu0
      %v495 = vpop.f32.mrb[0].mxu0
      %v496 = vadd.f32 0.0, %v495
      %v497 = vpop.f32.mrb[0].mxu0
      %498 = vmatprep.mubr.bf16.mxu0 0
      %499 = vmatmul.mubr.bf16.gmra.mrb[0].mxu0 %v295
      %v500 = vpop.f32.mrb[0].mxu0
      %v501 = vadd.f32 0.0, %v500
      %v502 = vpop.f32.mrb[0].mxu0
      %v503 = vpop.f32.mrb[0].mxu0
      %v504 = vadd.f32 0.0, %v503
      %v505 = vpop.f32.mrb[0].mxu0
      %506 = vmatprep.mubr.bf16.mxu0 0
      %507 = vmatmul.mubr.bf16.gmra.mrb[0].mxu0 %v296
      %v508 = vpop.f32.mrb[0].mxu0
      %v509 = vadd.f32 0.0, %v508
      %v510 = vpop.f32.mrb[0].mxu0
      %v511 = vpop.f32.mrb[0].mxu0
      %v512 = vadd.f32 0.0, %v511
      %v513 = vpop.f32.mrb[0].mxu0
      %514 = vmatprep.mubr.bf16.mxu0 0
      %515 = vmatmul.mubr.bf16.gmra.mrb[0].mxu0 %v297
      %v516 = vpop.f32.mrb[0].mxu0
      %v517 = vadd.f32 0.0, %v516
      %v518 = vpop.f32.mrb[0].mxu0
      %v519 = vpop.f32.mrb[0].mxu0
      %v520 = vadd.f32 0.0, %v519
      %v521 = vpop.f32.mrb[0].mxu0
      %522 = vdwg.mxu0
      %v523 = vpack.c.bf16 %v400, %v397
      %v524 = vpack.c.bf16 %v408, %v405
      %v525 = vpack.c.bf16 %v416, %v413
      %v526 = vpack.c.bf16 %v424, %v421
      %v527 = vpack.c.bf16 %v432, %v429
      %v528 = vpack.c.bf16 %v440, %v437
      %v529 = vpack.c.bf16 %v448, %v445
      %v530 = vpack.c.bf16 %v456, %v453
      %v531 = vpack.c.bf16 %v464, %v461
      %v532 = vpack.c.bf16 %v472, %v469
      %v533 = vpack.c.bf16 %v480, %v477
      %v534 = vpack.c.bf16 %v488, %v485
      %v535 = vpack.c.bf16 %v496, %v493
      %v536 = vpack.c.bf16 %v504, %v501
      %v537 = vpack.c.bf16 %v512, %v509
      %v538 = vpack.c.bf16 %v520, %v517
      %v555 = vunpack.c.l.b16 %v523
      %v556 = vunpack.c.h.b16 %v523
      %v557 = vunpack.c.l.b16 %v524
      %v558 = vunpack.c.h.b16 %v524
      %v559 = vunpack.c.l.b16 %v525
      %v560 = vunpack.c.h.b16 %v525
      %v561 = vunpack.c.l.b16 %v526
      %v562 = vunpack.c.h.b16 %v526
      %v563 = vunpack.c.l.b16 %v527
      %v564 = vunpack.c.h.b16 %v527
      %v565 = vunpack.c.l.b16 %v528
      %v566 = vunpack.c.h.b16 %v528
      %v567 = vunpack.c.l.b16 %v529
      %v568 = vunpack.c.h.b16 %v529
      %v569 = vunpack.c.l.b16 %v530
      %v570 = vunpack.c.h.b16 %v530
      %v571 = vunpack.c.l.b16 %v531
      %v572 = vunpack.c.h.b16 %v531
      %v573 = vunpack.c.l.b16 %v532
      %v574 = vunpack.c.h.b16 %v532
      %v575 = vunpack.c.l.b16 %v533
      %v576 = vunpack.c.h.b16 %v533
      %v577 = vunpack.c.l.b16 %v534
      %v578 = vunpack.c.h.b16 %v534
      %v579 = vunpack.c.l.b16 %v535
      %v580 = vunpack.c.h.b16 %v535
      %v581 = vunpack.c.l.b16 %v536
      %v582 = vunpack.c.h.b16 %v536
      %v583 = vunpack.c.l.b16 %v537
      %v584 = vunpack.c.h.b16 %v537
      %v585 = vunpack.c.l.b16 %v538
      %v586 = vunpack.c.h.b16 %v538
      %v587 = vpack.c.b16 %v555, %v555
      %v588 = vpack.c.b16 %v556, %v556
      %v589 = vpack.c.b16 %v557, %v557
      %v590 = vpack.c.b16 %v558, %v558
      %v591 = vpack.c.b16 %v559, %v559
      %v592 = vpack.c.b16 %v560, %v560
      %v593 = vpack.c.b16 %v561, %v561
      %v594 = vpack.c.b16 %v562, %v562
      %v595 = vpack.c.b16 %v563, %v563
      %v596 = vpack.c.b16 %v564, %v564
      %v597 = vpack.c.b16 %v565, %v565
      %v598 = vpack.c.b16 %v566, %v566
      %v599 = vpack.c.b16 %v567, %v567
      %v600 = vpack.c.b16 %v568, %v568
      %v601 = vpack.c.b16 %v569, %v569
      %v602 = vpack.c.b16 %v570, %v570
      %v603 = vpack.c.b16 %v571, %v571
      %v604 = vpack.c.b16 %v572, %v572
      %v605 = vpack.c.b16 %v573, %v573
      %v606 = vpack.c.b16 %v574, %v574
      %v607 = vpack.c.b16 %v575, %v575
      %v608 = vpack.c.b16 %v576, %v576
      %v609 = vpack.c.b16 %v577, %v577
      %v610 = vpack.c.b16 %v578, %v578
      %v611 = vpack.c.b16 %v579, %v579
      %v612 = vpack.c.b16 %v580, %v580
      %v613 = vpack.c.b16 %v581, %v581
      %v614 = vpack.c.b16 %v582, %v582
      %v615 = vpack.c.b16 %v583, %v583
      %v616 = vpack.c.b16 %v584, %v584
      %v617 = vpack.c.b16 %v585, %v585
      %v618 = vpack.c.b16 %v586, %v586
      %vm651 = vcmask 257024
      %652 = vst.msk [vmem:[%s165] sm:$0xf] %vm651, %v587
      %653 = vst.msk [vmem:[%s165 + $0x4] sm:$0xf] %vm651, %v588
      %654 = vst.msk [vmem:[%s165 + $0x8] sm:$0xf] %vm651, %v589
      %655 = vst.msk [vmem:[%s165 + $0xc] sm:$0xf] %vm651, %v590
      %656 = vst.msk [vmem:[%s165 + $0x10] sm:$0xf] %vm651, %v591
      %657 = vst.msk [vmem:[%s165 + $0x14] sm:$0xf] %vm651, %v592
      %658 = vst.msk [vmem:[%s165 + $0x18] sm:$0xf] %vm651, %v593
      %659 = vst.msk [vmem:[%s165 + $0x1c] sm:$0xf] %vm651, %v594
      %660 = vst.msk [vmem:[%s165 + $0x20] sm:$0xf] %vm651, %v595
      %661 = vst.msk [vmem:[%s165 + $0x24] sm:$0xf] %vm651, %v596
      %662 = vst.msk [vmem:[%s165 + $0x28] sm:$0xf] %vm651, %v597
      %663 = vst.msk [vmem:[%s165 + $0x2c] sm:$0xf] %vm651, %v598
      %664 = vst.msk [vmem:[%s165 + $0x30] sm:$0xf] %vm651, %v599
      %665 = vst.msk [vmem:[%s165 + $0x34] sm:$0xf] %vm651, %v600
      %666 = vst.msk [vmem:[%s165 + $0x38] sm:$0xf] %vm651, %v601
      %667 = vst.msk [vmem:[%s165 + $0x3c] sm:$0xf] %vm651, %v602
      %668 = vst.msk [vmem:[%s165 + $0x40] sm:$0xf] %vm651, %v603
      %669 = vst.msk [vmem:[%s165 + $0x44] sm:$0xf] %vm651, %v604
      %670 = vst.msk [vmem:[%s165 + $0x48] sm:$0xf] %vm651, %v605
      %671 = vst.msk [vmem:[%s165 + $0x4c] sm:$0xf] %vm651, %v606
      %672 = vst.msk [vmem:[%s165 + $0x50] sm:$0xf] %vm651, %v607
      %673 = vst.msk [vmem:[%s165 + $0x54] sm:$0xf] %vm651, %v608
      %674 = vst.msk [vmem:[%s165 + $0x58] sm:$0xf] %vm651, %v609
      %675 = vst.msk [vmem:[%s165 + $0x5c] sm:$0xf] %vm651, %v610
      %676 = vst.msk [vmem:[%s165 + $0x60] sm:$0xf] %vm651, %v611
      %677 = vst.msk [vmem:[%s165 + $0x64] sm:$0xf] %vm651, %v612
      %678 = vst.msk [vmem:[%s165 + $0x68] sm:$0xf] %vm651, %v613
      %679 = vst.msk [vmem:[%s165 + $0x6c] sm:$0xf] %vm651, %v614
      %680 = vst.msk [vmem:[%s165 + $0x70] sm:$0xf] %vm651, %v615
      %681 = vst.msk [vmem:[%s165 + $0x74] sm:$0xf] %vm651, %v616
      %682 = vst.msk [vmem:[%s165 + $0x78] sm:$0xf] %vm651, %v617
      %683 = vst.msk [vmem:[%s165 + $0x7c] sm:$0xf] %vm651, %v618
      %p684 = scmp.lt.s32.totalorder %s17, 1
      %s685 = scalar_select %p684, %s17, 1
      %p686 = scmp.lt.s32.totalorder %s18, 3
      %s687 = scalar_select %p686, %s18, 3
      %s688 = smul.addr %s687, 32
      %s689 = smul.addr %s685, 128
      %s690 = sadd.s32 %s688, %s689
      %s691 = smul.addr %s690, 4
      %s692 = scalar_lea.vmem %s2, %s691
      // Predicated region
      $region29: #{tpu_custom_call.1} parent=27 // pred_check
        %p693 = pneg %p92
      $region30: #{tpu_custom_call.1} parent=27 // pred_check_branch
        %695 = sbr.rel (%p693) target = $region32
      $region31: #{tpu_custom_call.1} parent=27 // pred_region
        _
      $region32: #{tpu_custom_call.1} parent=27 // pred_fallthru
        _
    $region28: #{tpu_custom_call.1} parent=5 // pred_fallthru
      _
    %p696 = scmp.le.s32.totalorder 2, %s8
    // Predicated region
    $region33: #{tpu_custom_call.1} parent=5 // pred_check
      %p697 = pneg %p696
    $region34: #{tpu_custom_call.1} parent=5 // pred_check_branch
      %699 = sbr.rel (%p697) target = $region36
    $region35: #{tpu_custom_call.1} parent=5 // pred_region
      %s700 = ssub.s32 %s8, 2
      // Predicated region
      $region37: #{tpu_custom_call.1} parent=35 // pred_check
        %p701 = pneg %p98
      $region38: #{tpu_custom_call.1} parent=35 // pred_check_branch
        %703 = sbr.rel (%p701) target = $region40
      $region39: #{tpu_custom_call.1} parent=35 // pred_region
        %p704 = scmp.lt.s32.totalorder %s19, 1
        %s705 = scalar_select %p704, %s19, 1
        %p706 = scmp.lt.s32.totalorder %s20, 3
        %s707 = scalar_select %p706, %s20, 3
        %s708 = smul.addr %s707, 32
        %s709 = smul.addr %s705, 128
        %s710 = sadd.s32 %s708, %s709
        %s711 = smul.addr %s710, 4
        %s712 = scalar_lea.vmem %s2, %s711
      $region40: #{tpu_custom_call.1} parent=35 // pred_fallthru
        _
    $region36: #{tpu_custom_call.1} parent=5 // pred_fallthru
      _
  $region6: #{tpu_custom_call.1} parent=0 // loop_footer
    %s12 = sadd.s32 1, %s8
  $region7: #{tpu_custom_call.1} parent=0 // loop_footer_branch
    %7 = sbr.rel target = $region3
  $region8: #{tpu_custom_call.1} parent=0 // loop_exit
    _

</llo_original>
